<compile_context>
chip_gen: v5e
topology: v5e:2x2
jax: 0.10.0
libtpu: 0.0.40
codegen_flags: <defaults>
</compile_context>

<pallas_src>
import functools
import math

import jax
import jax.numpy as jnp
from jax.experimental import pallas as pl
from jax.experimental.pallas import tpu as pltpu

# ----- hyperparameters (stand-in for `args`) --------------------------------
N_ENT = 32      # number of entities
N_REL = 8       # number of relations
DIM   = 32      # embedding dimension
P     = 2       # norm order (1 or 2)
GAMMA = 12.0    # margin
EPS   = 1e-12   # F.normalize default eps


def _round_up(x, m):
    return (x + m - 1) // m * m


def _choose_tile(batch, max_tile_b):
    """Pad batch only to a 128 multiple; pick tile_b dividing b_pad, preferring
    >= 2 tiles (so both v7x TensorCores get work) and the largest tile size."""
    b_pad = _round_up(max(batch, 1), 128)
    n128 = b_pad // 128
    max_k = max(1, min(max_tile_b // 128, n128))
    want_tiles = 2 if n128 >= 2 else 1
    best_k = 1
    for k in range(1, max_k + 1):
        if n128 % k == 0 and (n128 // k) >= want_tiles:
            best_k = k
    return b_pad, 128 * best_k


# ----- shared score math (operands in [D, TB] layout: dim on sublanes) -------
def _transd_score(h_pack, t_pack, r_pack, r_sign, *, dim, p, gamma, eps):
    """h/t/r_pack: [2*dim, TB] f32 = [embed ; proj-embed].  r_sign: [1, TB]."""

    def l2_normalize(x):
        # F.normalize(x, 2): x / max(||x||, eps) == x * rsqrt(max(||x||^2, eps^2))
        sumsq = jnp.sum(x * x, axis=0, keepdims=True)            # sublane reduce
        return x * jax.lax.rsqrt(jnp.maximum(sumsq, eps * eps))  # EUP rsqrt

    def transfer(e, e_t, rt):
        proj = jnp.sum(e * e_t, axis=0, keepdims=True)
        return l2_normalize(e + proj * rt)

    r_t = r_pack[dim:]
    r = l2_normalize(r_pack[:dim]) * r_sign      # cat([W, -W])[r] then normalize
    # Consume the h-branch fully before the t-branch (keeps vreg live set low).
    h = transfer(l2_normalize(h_pack[:dim]), h_pack[dim:], r_t)
    t = transfer(l2_normalize(t_pack[:dim]), t_pack[dim:], r_t)

    dist = h + r - t
    if p == 1:
        nrm = jnp.sum(jnp.abs(dist), axis=0, keepdims=True)
    else:  # p == 2
        nrm = jnp.sqrt(jnp.sum(dist * dist, axis=0, keepdims=True))
    return gamma - nrm


# ----- kernel A: in-kernel one-hot MXU gather (tables resident in VMEM) ------
def transd_gather_kernel(idx_ref, ent_ref, rel_ref, o_ref, *,
                         n_rel, dim, p, gamma, eps):
    """idx_ref: [3, TB] int32 rows = (h, t, r_raw); ent_ref: [2D, n_ent];
    rel_ref: [2D, n_rel]; o_ref: [1, TB] f32 scores."""
    tb = o_ref.shape[-1]
    h_i = idx_ref[0:1, :]
    t_i = idx_ref[1:2, :]
    r_raw = idx_ref[2:3, :]
    r_i = jnp.where(r_raw >= n_rel, r_raw - n_rel, r_raw)
    r_sign = jnp.where(r_raw >= n_rel, -1.0, 1.0).astype(jnp.float32)  # (1, TB)

    ent_tab = ent_ref[...]                      # (2D, n_ent)
    rel_tab = rel_ref[...]                      # (2D, n_rel)
    n_ent = ent_tab.shape[-1]

    def onehot_gather(tab, ids, n):
        iota = jax.lax.broadcasted_iota(jnp.int32, (n, tb), 0)
        onehot = (iota == ids).astype(jnp.float32)                 # (n, TB)
        # MXU matmul lands directly in the [2D, TB] layout the math wants.
        return jnp.dot(tab, onehot, preferred_element_type=jnp.float32)

    h_pack = onehot_gather(ent_tab, h_i, n_ent)
    t_pack = onehot_gather(ent_tab, t_i, n_ent)
    r_pack = onehot_gather(rel_tab, r_i, rel_tab.shape[-1])

    o_ref[...] = _transd_score(h_pack, t_pack, r_pack, r_sign,
                               dim=dim, p=p, gamma=gamma, eps=eps)


# ----- kernel B: fallback, pre-gathered packed input (tables too big) --------
def transd_packed_kernel(idx_ref, packed_ref, o_ref, *,
                         n_rel, dim, p, gamma, eps):
    """idx_ref: [3, TB] int32; packed_ref: [3, 2D, TB] f32 = (h, t, r) packs."""
    r_raw = idx_ref[2:3, :]
    r_sign = jnp.where(r_raw >= n_rel, -1.0, 1.0).astype(jnp.float32)
    o_ref[...] = _transd_score(packed_ref[0], packed_ref[1], packed_ref[2],
                               r_sign, dim=dim, p=p, gamma=gamma, eps=eps)


# ----- forward glue -----------------------------------------------------------
def transd_forward(params, h_idx, r_idx, t_idx, *, p=P, gamma=GAMMA, eps=EPS,
                   max_tile_b=4096, force_xla_gather=False):
    ent_w, rel_w, proj_ent_w, proj_rel_w = params
    n_ent, dim = ent_w.shape
    n_rel = rel_w.shape[0]
    batch = h_idx.shape[0]

    b_pad, tile_b = _choose_tile(batch, max_tile_b)
    pad = b_pad - batch
    n_tiles = b_pad // tile_b

    idx = jnp.stack([h_idx.astype(jnp.int32),
                     t_idx.astype(jnp.int32),
                     r_idx.astype(jnp.int32)], axis=0)        # (3, B)
    if pad:
        idx = jnp.pad(idx, ((0, 0), (0, pad)))                # padded lanes -> row 0

    # Tables pre-transposed & paired: [embed ; proj-embed] -> (2D, N) each (tiny).
    ent_cat_t = jnp.concatenate([ent_w, proj_ent_w], axis=1).T.astype(jnp.float32)
    rel_cat_t = jnp.concatenate([rel_w, proj_rel_w], axis=1).T.astype(jnp.float32)

    table_bytes = (ent_cat_t.size + rel_cat_t.size) * 4
    use_in_kernel_gather = (table_bytes <= 4 * 1024 * 1024) and not force_xla_gather

    cparams = pltpu.CompilerParams(
        dimension_semantics=("parallel",),
        vmem_limit_bytes=48 * 1024 * 1024,
    )

    if use_in_kernel_gather:
        kernel = functools.partial(transd_gather_kernel, n_rel=n_rel, dim=dim,
                                   p=p, gamma=gamma, eps=eps)
        out = pl.pallas_call(
            kernel,
            out_shape=jax.ShapeDtypeStruct((1, b_pad), jnp.float32),
            grid=(n_tiles,),
            in_specs=[
                pl.BlockSpec((3, tile_b), lambda i: (0, i)),
                pl.BlockSpec((2 * dim, n_ent), lambda i: (0, 0)),
                pl.BlockSpec((2 * dim, n_rel), lambda i: (0, 0)),
            ],
            out_specs=pl.BlockSpec((1, tile_b), lambda i: (0, i)),
            compiler_params=cparams,
        )(idx, ent_cat_t, rel_cat_t)
    else:
        # Tables exceed VMEM budget: gather in XLA, but directly from the
        # pre-transposed tables so the packed array is born in [2D, B] layout.
        r_raw = idx[2]
        r_mod = jnp.where(r_raw >= n_rel, r_raw - n_rel, r_raw)
        packed = jnp.stack([
            jnp.take(ent_cat_t, idx[0], axis=1),
            jnp.take(ent_cat_t, idx[1], axis=1),
            jnp.take(rel_cat_t, r_mod, axis=1),
        ], axis=0)                                            # (3, 2D, b_pad)
        kernel = functools.partial(transd_packed_kernel, n_rel=n_rel, dim=dim,
                                   p=p, gamma=gamma, eps=eps)
        out = pl.pallas_call(
            kernel,
            out_shape=jax.ShapeDtypeStruct((1, b_pad), jnp.float32),
            grid=(n_tiles,),
            in_specs=[
                pl.BlockSpec((3, tile_b), lambda i: (0, i)),
                pl.BlockSpec((3, 2 * dim, tile_b), lambda i: (0, 0, i)),
            ],
            out_specs=pl.BlockSpec((1, tile_b), lambda i: (0, i)),
            compiler_params=cparams,
        )(idx, packed)

    return out[0, :batch]


# ----- parameter init ---------------------------------------------------------
def xavier_uniform(key, shape):
    bound = math.sqrt(6.0 / (shape[0] + shape[1]))
    return jax.random.uniform(key, shape, jnp.float32, -bound, bound)


# ----- pure-JAX reference for sanity ------------------------------------------
def _ref_forward(params, h_idx, r_idx, t_idx):
    ent_w, rel_w, proj_ent_w, proj_rel_w = params

    def norm(x):
        n = jnp.sqrt(jnp.sum(x * x, -1, keepdims=True))
        return x / jnp.maximum(n, EPS)

    r_t = jnp.concatenate([proj_rel_w, proj_rel_w], 0)[r_idx]
    h_t = proj_ent_w[h_idx]
    t_t = proj_ent_w[t_idx]
    r = norm(jnp.concatenate([rel_w, -rel_w], 0)[r_idx])
    h = norm(ent_w[h_idx])
    t = norm(ent_w[t_idx])

    def transfer(e, e_t, rt):
        return norm(e + jnp.sum(e * e_t, -1, keepdims=True) * rt)

    h = transfer(h, h_t, r_t)
    t = transfer(t, t_t, r_t)
    dist = h + r - t
    if P == 1:
        nrm = jnp.sum(jnp.abs(dist), -1)
    else:
        nrm = jnp.sqrt(jnp.sum(dist * dist, -1))
    return GAMMA - nrm


if __name__ == "__main__":
    key = jax.random.PRNGKey(0)
    k0, k1, k2, k3, k4, k5, k6 = jax.random.split(key, 7)

    params = (
        xavier_uniform(k0, (N_ENT, DIM)),   # ent_embed
        xavier_uniform(k1, (N_REL, DIM)),   # rel_embed
        xavier_uniform(k2, (N_ENT, DIM)),   # proj_ent_embed
        xavier_uniform(k3, (N_REL, DIM)),   # proj_rel_embed
    )

    B = 8
    h_idx = jax.random.randint(k4, (B,), 0, N_ENT)
    t_idx = jax.random.randint(k5, (B,), 0, N_ENT)
    # r indexes into the doubled (cat'ed) relation table: [0, 2*N_REL)
    r_idx = jax.random.randint(k6, (B,), 0, 2 * N_REL)

    ref = _ref_forward(params, h_idx, r_idx, t_idx)

    # Primary path: in-kernel one-hot MXU gather.
    fwd = jax.jit(transd_forward)
    score = jax.block_until_ready(fwd(params, h_idx, r_idx, t_idx))
    assert score.shape == (B,)
    assert jnp.allclose(score, ref, atol=1e-5, rtol=1e-5), \
        float(jnp.max(jnp.abs(score - ref)))

    # Fallback path (XLA gather from pre-transposed tables), exercised once.
    fwd_fb = jax.jit(functools.partial(transd_forward, force_xla_gather=True))
    score_fb = jax.block_until_ready(fwd_fb(params, h_idx, r_idx, t_idx))
    assert jnp.allclose(score_fb, ref, atol=1e-5, rtol=1e-5), \
        float(jnp.max(jnp.abs(score_fb - ref)))

    print("KERNEL_OK")
</pallas_src>

<mosaic_0001>
module attributes {stable_mosaic.version = 11 : i64} {
  func.func @transd_gather_kernel(%arg0: i32, %arg1: memref<3x128xi32, #tpu.memory_space<vmem>>, %arg2: memref<64x32xf32, #tpu.memory_space<vmem>>, %arg3: memref<64x8xf32, #tpu.memory_space<vmem>>, %arg4: memref<1x128xf32, #tpu.memory_space<vmem>>) attributes {dimension_semantics = [#tpu.dimension_semantics<parallel>], iteration_bounds = array<i64: 1>, scalar_prefetch = 0 : i64, scratch_operands = 0 : i64, tpu.core_type = #tpu.core_type<tc>, window_params = [{transform_indices = @transform_0, window_bounds = array<i64: 3, 128>}, {pipeline_mode = #tpu.pipeline_mode<synchronous>, transform_indices = @transform_1, window_bounds = array<i64: 64, 32>}, {pipeline_mode = #tpu.pipeline_mode<synchronous>, transform_indices = @transform_2, window_bounds = array<i64: 64, 8>}, {transform_indices = @transform_3, window_bounds = array<i64: 1, 128>}]} {
    %c0 = arith.constant 0 : index
    %c0_0 = arith.constant 0 : index
    %0 = vector.load %arg1[%c0, %c0_0] : memref<3x128xi32, #tpu.memory_space<vmem>>, vector<1x128xi32>
    %c1 = arith.constant 1 : index
    %c0_1 = arith.constant 0 : index
    %1 = vector.load %arg1[%c1, %c0_1] : memref<3x128xi32, #tpu.memory_space<vmem>>, vector<1x128xi32>
    %c2 = arith.constant 2 : index
    %c0_2 = arith.constant 0 : index
    %2 = vector.load %arg1[%c2, %c0_2] : memref<3x128xi32, #tpu.memory_space<vmem>>, vector<1x128xi32>
    %c8_i32 = arith.constant 8 : i32
    %3 = vector.broadcast %c8_i32 : i32 to vector<1x128xi32>
    %4 = arith.cmpi sge, %2, %3 : vector<1x128xi32>
    %c8_i32_3 = arith.constant 8 : i32
    %5 = vector.broadcast %c8_i32_3 : i32 to vector<1x128xi32>
    %6 = arith.subi %2, %5 : vector<1x128xi32>
    %7 = arith.select %4, %6, %2 : vector<1x128xi1>, vector<1x128xi32>
    %c8_i32_4 = arith.constant 8 : i32
    %8 = vector.broadcast %c8_i32_4 : i32 to vector<1x128xi32>
    %9 = arith.cmpi sge, %2, %8 : vector<1x128xi32>
    %cst = arith.constant -1.000000e+00 : f32
    %cst_5 = arith.constant 1.000000e+00 : f32
    %10 = vector.broadcast %cst : f32 to vector<1x128xf32>
    %11 = vector.broadcast %cst_5 : f32 to vector<1x128xf32>
    %12 = arith.select %9, %10, %11 : vector<1x128xi1>, vector<1x128xf32>
    %c0_6 = arith.constant 0 : index
    %c0_7 = arith.constant 0 : index
    %13 = vector.load %arg2[%c0_6, %c0_7] : memref<64x32xf32, #tpu.memory_space<vmem>>, vector<64x32xf32>
    %c0_8 = arith.constant 0 : index
    %c0_9 = arith.constant 0 : index
    %14 = vector.load %arg3[%c0_8, %c0_9] : memref<64x8xf32, #tpu.memory_space<vmem>>, vector<64x8xf32>
    %15 = tpu.iota {dimensions = array<i32: 0>} : vector<32x128xi32>
    %16 = vector.broadcast %0 : vector<1x128xi32> to vector<32x128xi32>
    %17 = arith.cmpi eq, %15, %16 : vector<32x128xi32>
    %18 = arith.extui %17 : vector<32x128xi1> to vector<32x128xi32>
    %19 = arith.sitofp %18 : vector<32x128xi32> to vector<32x128xf32>
    %cst_10 = arith.constant dense<0.000000e+00> : vector<64x128xf32>
    %20 = tpu.matmul %13, %19, %cst_10 {dimension_numbers = #tpu.dot_dimension_numbers<[1], [0], [0], [1], [0, 0, 1, 1], [], []>} : vector<64x32xf32>, vector<32x128xf32>, vector<64x128xf32> -> vector<64x128xf32>
    %21 = tpu.iota {dimensions = array<i32: 0>} : vector<32x128xi32>
    %22 = vector.broadcast %1 : vector<1x128xi32> to vector<32x128xi32>
    %23 = arith.cmpi eq, %21, %22 : vector<32x128xi32>
    %24 = arith.extui %23 : vector<32x128xi1> to vector<32x128xi32>
    %25 = arith.sitofp %24 : vector<32x128xi32> to vector<32x128xf32>
    %cst_11 = arith.constant dense<0.000000e+00> : vector<64x128xf32>
    %26 = tpu.matmul %13, %25, %cst_11 {dimension_numbers = #tpu.dot_dimension_numbers<[1], [0], [0], [1], [0, 0, 1, 1], [], []>} : vector<64x32xf32>, vector<32x128xf32>, vector<64x128xf32> -> vector<64x128xf32>
    %27 = tpu.iota {dimensions = array<i32: 0>} : vector<8x128xi32>
    %28 = vector.broadcast %7 : vector<1x128xi32> to vector<8x128xi32>
    %29 = arith.cmpi eq, %27, %28 : vector<8x128xi32>
    %30 = arith.extui %29 : vector<8x128xi1> to vector<8x128xi32>
    %31 = arith.sitofp %30 : vector<8x128xi32> to vector<8x128xf32>
    %cst_12 = arith.constant dense<0.000000e+00> : vector<64x128xf32>
    %32 = tpu.matmul %14, %31, %cst_12 {dimension_numbers = #tpu.dot_dimension_numbers<[1], [0], [0], [1], [0, 0, 1, 1], [], []>} : vector<64x8xf32>, vector<8x128xf32>, vector<64x128xf32> -> vector<64x128xf32>
    %33 = vector.extract_strided_slice %32 {offsets = [32, 0], sizes = [32, 128], strides = [1, 1]} : vector<64x128xf32> to vector<32x128xf32>
    %34 = vector.extract_strided_slice %32 {offsets = [0, 0], sizes = [32, 128], strides = [1, 1]} : vector<64x128xf32> to vector<32x128xf32>
    %35 = arith.mulf %34, %34 : vector<32x128xf32>
    %cst_13 = arith.constant dense<0.000000e+00> : vector<128xf32>
    %36 = vector.multi_reduction <add>, %35, %cst_13 [0] : vector<32x128xf32> to vector<128xf32>
    %37 = vector.shape_cast %36 : vector<128xf32> to vector<1x128xf32>
    %cst_14 = arith.constant 1.000000e-24 : f32
    %38 = vector.broadcast %cst_14 : f32 to vector<1x128xf32>
    %39 = arith.maximumf %37, %38 : vector<1x128xf32>
    %40 = math.rsqrt %39 : vector<1x128xf32>
    %41 = vector.broadcast %40 : vector<1x128xf32> to vector<32x128xf32>
    %42 = arith.mulf %34, %41 : vector<32x128xf32>
    %43 = vector.broadcast %12 : vector<1x128xf32> to vector<32x128xf32>
    %44 = arith.mulf %42, %43 : vector<32x128xf32>
    %45 = vector.extract_strided_slice %20 {offsets = [0, 0], sizes = [32, 128], strides = [1, 1]} : vector<64x128xf32> to vector<32x128xf32>
    %46 = arith.mulf %45, %45 : vector<32x128xf32>
    %cst_15 = arith.constant dense<0.000000e+00> : vector<128xf32>
    %47 = vector.multi_reduction <add>, %46, %cst_15 [0] : vector<32x128xf32> to vector<128xf32>
    %48 = vector.shape_cast %47 : vector<128xf32> to vector<1x128xf32>
    %cst_16 = arith.constant 1.000000e-24 : f32
    %49 = vector.broadcast %cst_16 : f32 to vector<1x128xf32>
    %50 = arith.maximumf %48, %49 : vector<1x128xf32>
    %51 = math.rsqrt %50 : vector<1x128xf32>
    %52 = vector.broadcast %51 : vector<1x128xf32> to vector<32x128xf32>
    %53 = arith.mulf %45, %52 : vector<32x128xf32>
    %54 = vector.extract_strided_slice %20 {offsets = [32, 0], sizes = [32, 128], strides = [1, 1]} : vector<64x128xf32> to vector<32x128xf32>
    %55 = arith.mulf %53, %54 : vector<32x128xf32>
    %cst_17 = arith.constant dense<0.000000e+00> : vector<128xf32>
    %56 = vector.multi_reduction <add>, %55, %cst_17 [0] : vector<32x128xf32> to vector<128xf32>
    %57 = vector.shape_cast %56 : vector<128xf32> to vector<1x128xf32>
    %58 = vector.broadcast %57 : vector<1x128xf32> to vector<32x128xf32>
    %59 = arith.mulf %58, %33 : vector<32x128xf32>
    %60 = arith.addf %53, %59 : vector<32x128xf32>
    %61 = arith.mulf %60, %60 : vector<32x128xf32>
    %cst_18 = arith.constant dense<0.000000e+00> : vector<128xf32>
    %62 = vector.multi_reduction <add>, %61, %cst_18 [0] : vector<32x128xf32> to vector<128xf32>
    %63 = vector.shape_cast %62 : vector<128xf32> to vector<1x128xf32>
    %cst_19 = arith.constant 1.000000e-24 : f32
    %64 = vector.broadcast %cst_19 : f32 to vector<1x128xf32>
    %65 = arith.maximumf %63, %64 : vector<1x128xf32>
    %66 = math.rsqrt %65 : vector<1x128xf32>
    %67 = vector.broadcast %66 : vector<1x128xf32> to vector<32x128xf32>
    %68 = arith.mulf %60, %67 : vector<32x128xf32>
    %69 = vector.extract_strided_slice %26 {offsets = [0, 0], sizes = [32, 128], strides = [1, 1]} : vector<64x128xf32> to vector<32x128xf32>
    %70 = arith.mulf %69, %69 : vector<32x128xf32>
    %cst_20 = arith.constant dense<0.000000e+00> : vector<128xf32>
    %71 = vector.multi_reduction <add>, %70, %cst_20 [0] : vector<32x128xf32> to vector<128xf32>
    %72 = vector.shape_cast %71 : vector<128xf32> to vector<1x128xf32>
    %cst_21 = arith.constant 1.000000e-24 : f32
    %73 = vector.broadcast %cst_21 : f32 to vector<1x128xf32>
    %74 = arith.maximumf %72, %73 : vector<1x128xf32>
    %75 = math.rsqrt %74 : vector<1x128xf32>
    %76 = vector.broadcast %75 : vector<1x128xf32> to vector<32x128xf32>
    %77 = arith.mulf %69, %76 : vector<32x128xf32>
    %78 = vector.extract_strided_slice %26 {offsets = [32, 0], sizes = [32, 128], strides = [1, 1]} : vector<64x128xf32> to vector<32x128xf32>
    %79 = arith.mulf %77, %78 : vector<32x128xf32>
    %cst_22 = arith.constant dense<0.000000e+00> : vector<128xf32>
    %80 = vector.multi_reduction <add>, %79, %cst_22 [0] : vector<32x128xf32> to vector<128xf32>
    %81 = vector.shape_cast %80 : vector<128xf32> to vector<1x128xf32>
    %82 = vector.broadcast %81 : vector<1x128xf32> to vector<32x128xf32>
    %83 = arith.mulf %82, %33 : vector<32x128xf32>
    %84 = arith.addf %77, %83 : vector<32x128xf32>
    %85 = arith.mulf %84, %84 : vector<32x128xf32>
    %cst_23 = arith.constant dense<0.000000e+00> : vector<128xf32>
    %86 = vector.multi_reduction <add>, %85, %cst_23 [0] : vector<32x128xf32> to vector<128xf32>
    %87 = vector.shape_cast %86 : vector<128xf32> to vector<1x128xf32>
    %cst_24 = arith.constant 1.000000e-24 : f32
    %88 = vector.broadcast %cst_24 : f32 to vector<1x128xf32>
    %89 = arith.maximumf %87, %88 : vector<1x128xf32>
    %90 = math.rsqrt %89 : vector<1x128xf32>
    %91 = vector.broadcast %90 : vector<1x128xf32> to vector<32x128xf32>
    %92 = arith.mulf %84, %91 : vector<32x128xf32>
    %93 = arith.addf %68, %44 : vector<32x128xf32>
    %94 = arith.subf %93, %92 : vector<32x128xf32>
    %95 = arith.mulf %94, %94 : vector<32x128xf32>
    %cst_25 = arith.constant dense<0.000000e+00> : vector<128xf32>
    %96 = vector.multi_reduction <add>, %95, %cst_25 [0] : vector<32x128xf32> to vector<128xf32>
    %97 = vector.shape_cast %96 : vector<128xf32> to vector<1x128xf32>
    %98 = math.sqrt %97 : vector<1x128xf32>
    %cst_26 = arith.constant 1.200000e+01 : f32
    %99 = vector.broadcast %cst_26 : f32 to vector<1x128xf32>
    %100 = arith.subf %99, %98 : vector<1x128xf32>
    %c0_27 = arith.constant 0 : index
    %c0_28 = arith.constant 0 : index
    %101 = vector.load %arg4[%c0_27, %c0_28] : memref<1x128xf32, #tpu.memory_space<vmem>>, vector<1x128xf32>
    tpu.vector_store %arg4[%c0_27, %c0_28], %100 {strides = array<i32>} : memref<1x128xf32, #tpu.memory_space<vmem>>, vector<1x128xf32>,
    return
  }
  func.func @transform_0(%arg0: i32) -> (i32, i32) {
    %c0_i32 = arith.constant 0 : i32
    %c0_i32_0 = arith.constant 0 : i32
    return %c0_i32, %arg0 : i32, i32
  }
  func.func @transform_1(%arg0: i32) -> (i32, i32) {
    %c0_i32 = arith.constant 0 : i32
    %c0_i32_0 = arith.constant 0 : i32
    %c0_i32_1 = arith.constant 0 : i32
    return %c0_i32, %c0_i32_0 : i32, i32
  }
  func.func @transform_2(%arg0: i32) -> (i32, i32) {
    %c0_i32 = arith.constant 0 : i32
    %c0_i32_0 = arith.constant 0 : i32
    %c0_i32_1 = arith.constant 0 : i32
    return %c0_i32, %c0_i32_0 : i32, i32
  }
  func.func @transform_3(%arg0: i32) -> (i32, i32) {
    %c0_i32 = arith.constant 0 : i32
    %c0_i32_0 = arith.constant 0 : i32
    return %c0_i32, %arg0 : i32, i32
  }
}

</mosaic_0001>

<llo_original>
// kernel: transd_forward.1
$region0: #{transd_forward.1}
  #allocation0 [shape = 'u32[]', space=smem, size = 0x4, offset = 0x4, fixed_abs, tag = 'smem constant byte address 0x4 - core index']
  #allocation1 [shape = 'u32[72,128]{1,0:T(1,128)}', space=vmem, size = 0x9000, scoped, tag = 'internal scratch']
  %s0 = inlined_call_operand.vmem [shape: s32[3,128], index: 0, kind: input, shape index: {}]
  %s1 = inlined_call_operand.vmem [shape: f32[64,32], index: 1, kind: input, shape index: {}]
  %s2 = inlined_call_operand.vmem [shape: f32[64,8], index: 2, kind: input, shape index: {}]
  %s3 = inlined_call_operand.vmem [shape: f32[1,128], index: 3, kind: output, shape index: {}]
  %s4 = sld [smem:[#allocation0]]
  $region22: #{transd_forward.1} parent=0
    _
  %s6 = ssub.s32 1, %s4
  %s7 = scalar_select 0, %s6, %s4
  // Predicated region
  $region2: #{transd_forward.1} parent=0 // pred_check
    _
  $region3: #{transd_forward.1} parent=0 // pred_check_branch
    %9 = sbr.rel (0) target = $region5
  $region4: #{transd_forward.1} parent=0 // pred_region
    _
  $region5: #{transd_forward.1} parent=0 // pred_fallthru
    _
  // Predicated region
  $region6: #{transd_forward.1} parent=0 // pred_check
    _
  $region7: #{transd_forward.1} parent=0 // pred_check_branch
    %11 = sbr.rel (0) target = $region9
  $region8: #{transd_forward.1} parent=0 // pred_region
    _
  $region9: #{transd_forward.1} parent=0 // pred_fallthru
    _
  // Predicated region
  $region10: #{transd_forward.1} parent=0 // pred_check
    _
  $region11: #{transd_forward.1} parent=0 // pred_check_branch
    %13 = sbr.rel (0) target = $region13
  $region12: #{transd_forward.1} parent=0 // pred_region
    _
  $region13: #{transd_forward.1} parent=0 // pred_fallthru
    _
  %v14 = vld [vmem:[%s0] sm:$0x1]
  %v15 = vld [vmem:[%s0 + $0x1] sm:$0x1]
  %v16 = vld [vmem:[%s0 + $0x2] sm:$0x1]
  %vm17 = vcmp.ge.s32.totalorder %v16, 8
  %v18 = vsub.s32 %v16, 8
  %v19 = vsel %vm17, %v18, %v16
  %v20 = vsel %vm17, -1.0, 1.0
  %v21 = vld [vmem:[%s1] sm:$0xff]
  %v22 = vld [vmem:[%s1 + $0x8] sm:$0xff]
  %v23 = vld [vmem:[%s1 + $0x10] sm:$0xff]
  %v24 = vld [vmem:[%s1 + $0x18] sm:$0xff]
  %v25 = vld [vmem:[%s1 + $0x20] sm:$0xff]
  %v26 = vld [vmem:[%s1 + $0x28] sm:$0xff]
  %v27 = vld [vmem:[%s1 + $0x30] sm:$0xff]
  %v28 = vld [vmem:[%s1 + $0x38] sm:$0xff]
  %v29 = vld [vmem:[%s2] sm:$0xff]
  %v30 = vld [vmem:[%s2 + $0x8] sm:$0xff]
  %v31 = vld [vmem:[%s2 + $0x10] sm:$0xff]
  %v32 = vld [vmem:[%s2 + $0x18] sm:$0xff]
  %v33 = vld [vmem:[%s2 + $0x20] sm:$0xff]
  %v34 = vld [vmem:[%s2 + $0x28] sm:$0xff]
  %v35 = vld [vmem:[%s2 + $0x30] sm:$0xff]
  %v36 = vld [vmem:[%s2 + $0x38] sm:$0xff]
  %v37 = vlaneseq
  %v38 = vshrl.u32 %v37, 7
  %v39 = vadd.s32 %v38, 8
  %v40 = vadd.s32 %v38, 16
  %v41 = vadd.s32 %v38, 24
  %v42 = vperm.slane %v14, 0
  %vm43 = vcmp.eq.s32.totalorder %v38, %v42
  %vm44 = vcmp.eq.s32.totalorder %v39, %v42
  %vm45 = vcmp.eq.s32.totalorder %v40, %v42
  %vm46 = vcmp.eq.s32.totalorder %v41, %v42
  %v47 = vsel %vm43, 1, 0
  %v48 = vsel %vm44, 1, 0
  %v49 = vsel %vm45, 1, 0
  %v50 = vsel %vm46, 1, 0
  %v51 = vcvt.s32.f32 %v47
  %v52 = vcvt.s32.f32 %v48
  %v53 = vcvt.s32.f32 %v49
  %v54 = vcvt.s32.f32 %v50
  %vm55 = vcmask 261120
  %v57 = vsel %vm55, %v21, 0
  %v60 = vsel %vm55, %v22, 0
  %v63 = vsel %vm55, %v23, 0
  %v66 = vsel %vm55, %v24, 0
  %v69 = vsel %vm55, %v25, 0
  %v72 = vsel %vm55, %v26, 0
  %v75 = vsel %vm55, %v27, 0
  %v78 = vsel %vm55, %v28, 0
  %80 = vmatpush.msra.mxu0 0.0
  %81 = vmatpush.msra.mxu0 0.0
  %82 = vmatpush.msra.mxu0 0.0
  %83 = vmatpush.msra.mxu0 0.0
  %84 = vmatpush.msra.mxu0 0.0
  %85 = vmatpush.msra.mxu0 0.0
  %86 = vmatpush.msra.mxu0 0.0
  %87 = vmatpush.msra.mxu0 0.0
  %88 = vmatpush.msra.mxu0 0.0
  %89 = vmatpush.msra.mxu0 0.0
  %90 = vmatpush.msra.mxu0 0.0
  %91 = vmatpush.msra.mxu0 0.0
  %92 = vmatpush.msra.mxu0 %v54
  %93 = vmatpush.msra.mxu0 %v53
  %94 = vmatpush.msra.mxu0 %v52
  %95 = vmatpush.msra.mxu0 %v51
  %96 = vmatmul.f32.gmra.mxu0 %v57
  %v97 = vpop.f32.mrf.mxu0
  %v98 = vadd.f32 0.0, %v97
  %99 = vmatmul.f32.gmra.mxu0 %v60
  %v100 = vpop.f32.mrf.mxu0
  %v101 = vadd.f32 0.0, %v100
  %102 = vmatmul.f32.gmra.mxu0 %v63
  %v103 = vpop.f32.mrf.mxu0
  %v104 = vadd.f32 0.0, %v103
  %105 = vmatmul.f32.gmra.mxu0 %v66
  %v106 = vpop.f32.mrf.mxu0
  %v107 = vadd.f32 0.0, %v106
  %108 = vmatmul.f32.gmra.mxu0 %v69
  %v109 = vpop.f32.mrf.mxu0
  %v110 = vadd.f32 0.0, %v109
  %111 = vmatmul.f32.gmra.mxu0 %v72
  %v112 = vpop.f32.mrf.mxu0
  %v113 = vadd.f32 0.0, %v112
  %114 = vmatmul.f32.gmra.mxu0 %v75
  %v115 = vpop.f32.mrf.mxu0
  %v116 = vadd.f32 0.0, %v115
  %117 = vmatmul.f32.gmra.mxu0 %v78
  %v118 = vpop.f32.mrf.mxu0
  %v119 = vadd.f32 0.0, %v118
  %120 = vdwg.mxu0
  %v121 = vperm.slane %v15, 0
  %vm122 = vcmp.eq.s32.totalorder %v38, %v121
  %vm123 = vcmp.eq.s32.totalorder %v39, %v121
  %vm124 = vcmp.eq.s32.totalorder %v40, %v121
  %vm125 = vcmp.eq.s32.totalorder %v41, %v121
  %v126 = vsel %vm122, 1, 0
  %v127 = vsel %vm123, 1, 0
  %v128 = vsel %vm124, 1, 0
  %v129 = vsel %vm125, 1, 0
  %v130 = vcvt.s32.f32 %v126
  %v131 = vcvt.s32.f32 %v127
  %v132 = vcvt.s32.f32 %v128
  %v133 = vcvt.s32.f32 %v129
  %134 = vmatpush.msra.mxu0 0.0
  %135 = vmatpush.msra.mxu0 0.0
  %136 = vmatpush.msra.mxu0 0.0
  %137 = vmatpush.msra.mxu0 0.0
  %138 = vmatpush.msra.mxu0 0.0
  %139 = vmatpush.msra.mxu0 0.0
  %140 = vmatpush.msra.mxu0 0.0
  %141 = vmatpush.msra.mxu0 0.0
  %142 = vmatpush.msra.mxu0 0.0
  %143 = vmatpush.msra.mxu0 0.0
  %144 = vmatpush.msra.mxu0 0.0
  %145 = vmatpush.msra.mxu0 0.0
  %146 = vmatpush.msra.mxu0 %v133
  %147 = vmatpush.msra.mxu0 %v132
  %148 = vmatpush.msra.mxu0 %v131
  %149 = vmatpush.msra.mxu0 %v130
  %150 = vmatmul.f32.gmra.mxu0 %v57
  %v151 = vpop.f32.mrf.mxu0
  %v152 = vadd.f32 0.0, %v151
  %153 = vmatmul.f32.gmra.mxu0 %v60
  %v154 = vpop.f32.mrf.mxu0
  %v155 = vadd.f32 0.0, %v154
  %156 = vmatmul.f32.gmra.mxu0 %v63
  %v157 = vpop.f32.mrf.mxu0
  %v158 = vadd.f32 0.0, %v157
  %159 = vmatmul.f32.gmra.mxu0 %v66
  %v160 = vpop.f32.mrf.mxu0
  %v161 = vadd.f32 0.0, %v160
  %162 = vmatmul.f32.gmra.mxu0 %v69
  %v163 = vpop.f32.mrf.mxu0
  %v164 = vadd.f32 0.0, %v163
  %165 = vmatmul.f32.gmra.mxu0 %v72
  %v166 = vpop.f32.mrf.mxu0
  %v167 = vadd.f32 0.0, %v166
  %168 = vmatmul.f32.gmra.mxu0 %v75
  %v169 = vpop.f32.mrf.mxu0
  %v170 = vadd.f32 0.0, %v169
  %171 = vmatmul.f32.gmra.mxu0 %v78
  %v172 = vpop.f32.mrf.mxu0
  %v173 = vadd.f32 0.0, %v172
  %174 = vdwg.mxu0
  %v175 = vperm.slane %v19, 0
  %vm176 = vcmp.eq.s32.totalorder %v38, %v175
  %v177 = vsel %vm176, 1, 0
  %v178 = vcvt.s32.f32 %v177
  %vm179 = vcmask 64512
  %v181 = vsel %vm179, %v29, 0
  %v184 = vsel %vm179, %v30, 0
  %v187 = vsel %vm179, %v31, 0
  %v190 = vsel %vm179, %v32, 0
  %v193 = vsel %vm179, %v33, 0
  %v196 = vsel %vm179, %v34, 0
  %v199 = vsel %vm179, %v35, 0
  %v202 = vsel %vm179, %v36, 0
  %204 = vmatpush.msra.mxu0 0.0
  %205 = vmatpush.msra.mxu0 0.0
  %206 = vmatpush.msra.mxu0 0.0
  %207 = vmatpush.msra.mxu0 0.0
  %208 = vmatpush.msra.mxu0 0.0
  %209 = vmatpush.msra.mxu0 0.0
  %210 = vmatpush.msra.mxu0 0.0
  %211 = vmatpush.msra.mxu0 0.0
  %212 = vmatpush.msra.mxu0 0.0
  %213 = vmatpush.msra.mxu0 0.0
  %214 = vmatpush.msra.mxu0 0.0
  %215 = vmatpush.msra.mxu0 0.0
  %216 = vmatpush.msra.mxu0 0.0
  %217 = vmatpush.msra.mxu0 0.0
  %218 = vmatpush.msra.mxu0 0.0
  %219 = vmatpush.msra.mxu0 %v178
  %220 = vmatmul.f32.gmra.mxu0 %v181
  %v221 = vpop.f32.mrf.mxu0
  %v222 = vadd.f32 0.0, %v221
  %223 = vmatmul.f32.gmra.mxu0 %v184
  %v224 = vpop.f32.mrf.mxu0
  %v225 = vadd.f32 0.0, %v224
  %226 = vmatmul.f32.gmra.mxu0 %v187
  %v227 = vpop.f32.mrf.mxu0
  %v228 = vadd.f32 0.0, %v227
  %229 = vmatmul.f32.gmra.mxu0 %v190
  %v230 = vpop.f32.mrf.mxu0
  %v231 = vadd.f32 0.0, %v230
  %232 = vmatmul.f32.gmra.mxu0 %v193
  %v233 = vpop.f32.mrf.mxu0
  %v234 = vadd.f32 0.0, %v233
  %235 = vmatmul.f32.gmra.mxu0 %v196
  %v236 = vpop.f32.mrf.mxu0
  %v237 = vadd.f32 0.0, %v236
  %238 = vmatmul.f32.gmra.mxu0 %v199
  %v239 = vpop.f32.mrf.mxu0
  %v240 = vadd.f32 0.0, %v239
  %241 = vmatmul.f32.gmra.mxu0 %v202
  %v242 = vpop.f32.mrf.mxu0
  %v243 = vadd.f32 0.0, %v242
  %244 = vdwg.mxu0
  %v245 = vmul.f32 %v222, %v222
  %v246 = vmul.f32 %v225, %v225
  %v247 = vmul.f32 %v228, %v228
  %v248 = vmul.f32 %v231, %v231
  %v249 = vadd.f32 %v245, %v246
  %v250 = vadd.f32 %v249, %v247
  %v251 = vadd.f32 %v250, %v248
  %v252 = vrot.slane %v251, 4
  %v253 = vadd.f32 %v251, %v252
  %v254 = vrot.slane %v253, 2
  %v255 = vadd.f32 %v253, %v254
  %v256 = vrot.slane %v255, 1
  %v257 = vadd.f32 %v255, %v256
  %v258 = vmax.f32 %v257, 1e-24
  %v259 = vrsqrt.pop %v258
  %v260 = vmul.f32 %v259, %v258
  %v261 = vmul.f32 %v260, %v259
  %v262 = vmul.f32 0.5, %v261
  %v263 = vsub.f32 1.5, %v262
  %v264 = vmul.f32 %v259, %v263
  %vm265 = vweird.f32 %v258
  %vm266 = vweird.f32 %v259
  %vm267 = vmor %vm265, %vm266
  %v268 = vsel %vm267, %v259, %v264
  %v269 = vmul.f32 %v222, %v268
  %v270 = vmul.f32 %v225, %v268
  %v271 = vmul.f32 %v228, %v268
  %v272 = vmul.f32 %v231, %v268
  %v273 = vperm.slane %v20, 0
  %v274 = vmul.f32 %v269, %v273
  %v275 = vmul.f32 %v270, %v273
  %v276 = vmul.f32 %v271, %v273
  %v277 = vmul.f32 %v272, %v273
  %v278 = vmul.f32 %v98, %v98
  %v279 = vmul.f32 %v101, %v101
  %v280 = vmul.f32 %v104, %v104
  %v281 = vmul.f32 %v107, %v107
  %v282 = vadd.f32 %v278, %v279
  %v283 = vadd.f32 %v282, %v280
  %v284 = vadd.f32 %v283, %v281
  %v285 = vrot.slane %v284, 4
  %v286 = vadd.f32 %v284, %v285
  %v287 = vrot.slane %v286, 2
  %v288 = vadd.f32 %v286, %v287
  %v289 = vrot.slane %v288, 1
  %v290 = vadd.f32 %v288, %v289
  %v291 = vmax.f32 %v290, 1e-24
  %v292 = vrsqrt.pop %v291
  %v293 = vmul.f32 %v292, %v291
  %v294 = vmul.f32 %v293, %v292
  %v295 = vmul.f32 0.5, %v294
  %v296 = vsub.f32 1.5, %v295
  %v297 = vmul.f32 %v292, %v296
  %vm298 = vweird.f32 %v291
  %vm299 = vweird.f32 %v292
  %vm300 = vmor %vm298, %vm299
  %v301 = vsel %vm300, %v292, %v297
  %v302 = vmul.f32 %v98, %v301
  %v303 = vmul.f32 %v101, %v301
  %v304 = vmul.f32 %v104, %v301
  %v305 = vmul.f32 %v107, %v301
  %v306 = vmul.f32 %v302, %v110
  %v307 = vmul.f32 %v303, %v113
  %v308 = vmul.f32 %v304, %v116
  %v309 = vmul.f32 %v305, %v119
  %v310 = vadd.f32 %v306, %v307
  %v311 = vadd.f32 %v310, %v308
  %v312 = vadd.f32 %v311, %v309
  %v313 = vrot.slane %v312, 4
  %v314 = vadd.f32 %v312, %v313
  %v315 = vrot.slane %v314, 2
  %v316 = vadd.f32 %v314, %v315
  %v317 = vrot.slane %v316, 1
  %v318 = vadd.f32 %v316, %v317
  %v319 = vmul.f32 %v318, %v234
  %v320 = vmul.f32 %v318, %v237
  %v321 = vmul.f32 %v318, %v240
  %v322 = vmul.f32 %v318, %v243
  %v323 = vadd.f32 %v302, %v319
  %v324 = vadd.f32 %v303, %v320
  %v325 = vadd.f32 %v304, %v321
  %v326 = vadd.f32 %v305, %v322
  %v327 = vmul.f32 %v323, %v323
  %v328 = vmul.f32 %v324, %v324
  %v329 = vmul.f32 %v325, %v325
  %v330 = vmul.f32 %v326, %v326
  %v331 = vadd.f32 %v327, %v328
  %v332 = vadd.f32 %v331, %v329
  %v333 = vadd.f32 %v332, %v330
  %v334 = vrot.slane %v333, 4
  %v335 = vadd.f32 %v333, %v334
  %v336 = vrot.slane %v335, 2
  %v337 = vadd.f32 %v335, %v336
  %v338 = vrot.slane %v337, 1
  %v339 = vadd.f32 %v337, %v338
  %v340 = vmax.f32 %v339, 1e-24
  %v341 = vrsqrt.pop %v340
  %v342 = vmul.f32 %v341, %v340
  %v343 = vmul.f32 %v342, %v341
  %v344 = vmul.f32 0.5, %v343
  %v345 = vsub.f32 1.5, %v344
  %v346 = vmul.f32 %v341, %v345
  %vm347 = vweird.f32 %v340
  %vm348 = vweird.f32 %v341
  %vm349 = vmor %vm347, %vm348
  %v350 = vsel %vm349, %v341, %v346
  %v351 = vmul.f32 %v323, %v350
  %v352 = vmul.f32 %v324, %v350
  %v353 = vmul.f32 %v325, %v350
  %v354 = vmul.f32 %v326, %v350
  %v355 = vmul.f32 %v152, %v152
  %v356 = vmul.f32 %v155, %v155
  %v357 = vmul.f32 %v158, %v158
  %v358 = vmul.f32 %v161, %v161
  %v359 = vadd.f32 %v355, %v356
  %v360 = vadd.f32 %v359, %v357
  %v361 = vadd.f32 %v360, %v358
  %v362 = vrot.slane %v361, 4
  %v363 = vadd.f32 %v361, %v362
  %v364 = vrot.slane %v363, 2
  %v365 = vadd.f32 %v363, %v364
  %v366 = vrot.slane %v365, 1
  %v367 = vadd.f32 %v365, %v366
  %v368 = vmax.f32 %v367, 1e-24
  %v369 = vrsqrt.pop %v368
  %v370 = vmul.f32 %v369, %v368
  %v371 = vmul.f32 %v370, %v369
  %v372 = vmul.f32 0.5, %v371
  %v373 = vsub.f32 1.5, %v372
  %v374 = vmul.f32 %v369, %v373
  %vm375 = vweird.f32 %v368
  %vm376 = vweird.f32 %v369
  %vm377 = vmor %vm375, %vm376
  %v378 = vsel %vm377, %v369, %v374
  %v379 = vmul.f32 %v152, %v378
  %v380 = vmul.f32 %v155, %v378
  %v381 = vmul.f32 %v158, %v378
  %v382 = vmul.f32 %v161, %v378
  %v383 = vmul.f32 %v379, %v164
  %v384 = vmul.f32 %v380, %v167
  %v385 = vmul.f32 %v381, %v170
  %v386 = vmul.f32 %v382, %v173
  %v387 = vadd.f32 %v383, %v384
  %v388 = vadd.f32 %v387, %v385
  %v389 = vadd.f32 %v388, %v386
  %v390 = vrot.slane %v389, 4
  %v391 = vadd.f32 %v389, %v390
  %v392 = vrot.slane %v391, 2
  %v393 = vadd.f32 %v391, %v392
  %v394 = vrot.slane %v393, 1
  %v395 = vadd.f32 %v393, %v394
  %v396 = vmul.f32 %v395, %v234
  %v397 = vmul.f32 %v395, %v237
  %v398 = vmul.f32 %v395, %v240
  %v399 = vmul.f32 %v395, %v243
  %v400 = vadd.f32 %v379, %v396
  %v401 = vadd.f32 %v380, %v397
  %v402 = vadd.f32 %v381, %v398
  %v403 = vadd.f32 %v382, %v399
  %v404 = vmul.f32 %v400, %v400
  %v405 = vmul.f32 %v401, %v401
  %v406 = vmul.f32 %v402, %v402
  %v407 = vmul.f32 %v403, %v403
  %v408 = vadd.f32 %v404, %v405
  %v409 = vadd.f32 %v408, %v406
  %v410 = vadd.f32 %v409, %v407
  %v411 = vrot.slane %v410, 4
  %v412 = vadd.f32 %v410, %v411
  %v413 = vrot.slane %v412, 2
  %v414 = vadd.f32 %v412, %v413
  %v415 = vrot.slane %v414, 1
  %v416 = vadd.f32 %v414, %v415
  %v417 = vmax.f32 %v416, 1e-24
  %v418 = vrsqrt.pop %v417
  %v419 = vmul.f32 %v418, %v417
  %v420 = vmul.f32 %v419, %v418
  %v421 = vmul.f32 0.5, %v420
  %v422 = vsub.f32 1.5, %v421
  %v423 = vmul.f32 %v418, %v422
  %vm424 = vweird.f32 %v417
  %vm425 = vweird.f32 %v418
  %vm426 = vmor %vm424, %vm425
  %v427 = vsel %vm426, %v418, %v423
  %v428 = vmul.f32 %v400, %v427
  %v429 = vmul.f32 %v401, %v427
  %v430 = vmul.f32 %v402, %v427
  %v431 = vmul.f32 %v403, %v427
  %v432 = vadd.f32 %v351, %v274
  %v433 = vadd.f32 %v352, %v275
  %v434 = vadd.f32 %v353, %v276
  %v435 = vadd.f32 %v354, %v277
  %v436 = vsub.f32 %v432, %v428
  %v437 = vsub.f32 %v433, %v429
  %v438 = vsub.f32 %v434, %v430
  %v439 = vsub.f32 %v435, %v431
  %v440 = vmul.f32 %v436, %v436
  %v441 = vmul.f32 %v437, %v437
  %v442 = vmul.f32 %v438, %v438
  %v443 = vmul.f32 %v439, %v439
  %v444 = vadd.f32 %v440, %v441
  %v445 = vadd.f32 %v444, %v442
  %v446 = vadd.f32 %v445, %v443
  %v447 = vrot.slane %v446, 4
  %v448 = vadd.f32 %v446, %v447
  %v449 = vrot.slane %v448, 2
  %v450 = vadd.f32 %v448, %v449
  %v451 = vrot.slane %v450, 1
  %v452 = vadd.f32 %v450, %v451
  %v453 = vrsqrt.pop %v452
  %v454 = vmul.f32 %v453, %v452
  %v455 = vmul.f32 %v454, %v453
  %v456 = vmul.f32 0.5, %v455
  %v457 = vsub.f32 1.5, %v456
  %v458 = vmul.f32 %v453, %v457
  %v459 = vmul.f32 %v452, %v458
  %vm460 = vcmp.eq.f32.partialorder %v452, inf
  %v461 = vsel %vm460, %v452, %v459
  %vm462 = vcmp.eq.f32.partialorder %v452, 0.0
  %v463 = vand.u32 %v452, 2147483648
  %v464 = vsel %vm462, %v463, %v461
  %v465 = vsub.f32 12.0, %v464
  %466 = vst [vmem:[%s3] sm:$0x1] %v465
  // Predicated region
  $region14: #{transd_forward.1} parent=0 // pred_check
    _
  $region15: #{transd_forward.1} parent=0 // pred_check_branch
    %468 = sbr.rel (0) target = $region17
  $region16: #{transd_forward.1} parent=0 // pred_region
    _
  $region17: #{transd_forward.1} parent=0 // pred_fallthru
    _
  // Predicated region
  $region18: #{transd_forward.1} parent=0 // pred_check
    _
  $region19: #{transd_forward.1} parent=0 // pred_check_branch
    %470 = sbr.rel (0) target = $region21
  $region20: #{transd_forward.1} parent=0 // pred_region
    _
  $region21: #{transd_forward.1} parent=0 // pred_fallthru
    _

</llo_original>
